<compile_context>
chip_gen: v7x
topology: tpu7x:2x2x1
jax: 0.10.0
libtpu: 0.0.40
codegen_flags: <defaults>
</compile_context>

<pallas_src>
import jax
import jax.numpy as jnp
from jax.experimental import pallas as pl
from jax.experimental.pallas import tpu as pltpu


def _se_kernel(x_ref, w1t_ref, w2t_ref, o_ref):
    # x_ref:  (bN, C, HW)   current sub-batch
    # w1t_ref: (C, C_red)   fc1 weight, pre-transposed
    # w2t_ref: (C_red, C)   fc2 weight, pre-transposed
    xb = x_ref[...].astype(jnp.float32)                       # (bN, C, HW)

    # Squeeze: global average pool over spatial for the whole sub-batch.
    pooled = jnp.mean(xb, axis=-1)                            # (bN, C)

    # Excite: two small MXU matmuls batched over bN.
    s1 = jnp.dot(pooled, w1t_ref[...].astype(jnp.float32),
                 preferred_element_type=jnp.float32)          # (bN, C_red)
    s1 = jnp.maximum(s1, 0.0)                                 # ReLU
    s2 = jnp.dot(s1, w2t_ref[...].astype(jnp.float32),
                 preferred_element_type=jnp.float32)          # (bN, C)
    gate = jax.nn.sigmoid(s2)                                 # (bN, C)

    # Scale: broadcast the per-(image, channel) gate over spatial.
    o_ref[...] = (xb * gate[:, :, None]).astype(o_ref.dtype)


def _pick_sub_batch(n, per_elem_bytes, target_bytes=2 << 20):
    """Largest divisor bN of n with bN*per_elem <= target and >= 2 grid steps."""
    best = 1
    for d in range(1, n + 1):
        if n % d:
            continue
        if d * per_elem_bytes > target_bytes:
            break
        if n // d >= 2 or n == 1:
            best = d
    return best


def se_module(x_nchw, w1, w2):
    """SEModule forward.  x_nchw: (N, C, H, W); w1: (C_red, C); w2: (C, C_red)."""
    n, c, h, w = x_nchw.shape
    hw = h * w
    x_flat = x_nchw.reshape(n, c, hw)

    # Pre-transpose the 1x1-conv weights so the in-kernel matmuls are
    # (bN, C) @ (C, C_red) and (bN, C_red) @ (C_red, C).
    w1t = jnp.transpose(w1)        # (C, C_red)
    w2t = jnp.transpose(w2)        # (C_red, C)

    per_elem_bytes = c * hw * x_flat.dtype.itemsize
    bn = _pick_sub_batch(n, per_elem_bytes)
    grid = (n // bn,)
    # TODO(synk): for very large HW (e.g. 56x56 early SE stages) where a single
    # (C, HW) plane exceeds the VMEM budget, tile the spatial axis with a
    # two-phase (pool-then-scale) grid instead of loading the full plane.

    out_flat = pl.pallas_call(
        _se_kernel,
        out_shape=jax.ShapeDtypeStruct((n, c, hw), x_nchw.dtype),
        grid_spec=pltpu.PrefetchScalarGridSpec(
            num_scalar_prefetch=0,
            grid=grid,
            in_specs=[
                pl.BlockSpec((bn, c, hw), lambda i: (i, 0, 0)),
                pl.BlockSpec(w1t.shape, lambda i: (0, 0)),   # resident (constant idx)
                pl.BlockSpec(w2t.shape, lambda i: (0, 0)),   # resident (constant idx)
            ],
            out_specs=pl.BlockSpec((bn, c, hw), lambda i: (i, 0, 0)),
        ),
        compiler_params=pltpu.CompilerParams(
            dimension_semantics=("parallel",)),
    )(x_flat, w1t, w2t)

    return out_flat.reshape(n, c, h, w)


def se_module_ref(x, w1, w2):
    # Pure-JAX reference of the PyTorch SEModule forward.
    pooled = jnp.mean(x, axis=(2, 3))                     # (N, C)
    s1 = jnp.maximum(pooled @ w1.T, 0.0)                  # (N, C_red)
    gate = jax.nn.sigmoid(s1 @ w2.T)                      # (N, C)
    return x * gate[:, :, None, None]


if __name__ == "__main__":
    # Small shapes consistent with the module: batch=2, channels=16,
    # reduction=4, spatial=16x16.
    N, C, H, W = 2, 16, 16, 16
    reduction = 4
    C_red = C // reduction

    key = jax.random.PRNGKey(0)
    kx, k1, k2 = jax.random.split(key, 3)
    x = jax.random.normal(kx, (N, C, H, W), dtype=jnp.float32)
    # Deterministic "kaiming-ish" init for the two bias-free 1x1 convs.
    w1 = jax.random.normal(k1, (C_red, C), dtype=jnp.float32) * (1.0 / C) ** 0.5
    w2 = jax.random.normal(k2, (C, C_red), dtype=jnp.float32) * (1.0 / C_red) ** 0.5

    out = se_module(x, w1, w2)
    out = jax.block_until_ready(out)

    ref = se_module_ref(x, w1, w2)
    assert out.shape == (N, C, H, W)
    assert jnp.allclose(out, ref, atol=1e-5, rtol=1e-5)

    print("KERNEL_OK")
</pallas_src>

<mosaic_0001>
module attributes {stable_mosaic.version = 11 : i64} {
  func.func @_se_kernel(%arg0: i32, %arg1: memref<1x16x256xf32, #tpu.memory_space<vmem>>, %arg2: memref<16x4xf32, #tpu.memory_space<vmem>>, %arg3: memref<4x16xf32, #tpu.memory_space<vmem>>, %arg4: memref<1x16x256xf32, #tpu.memory_space<vmem>>) attributes {dimension_semantics = [#tpu.dimension_semantics<parallel>], iteration_bounds = array<i64: 2>, scalar_prefetch = 0 : i64, scratch_operands = 0 : i64, tpu.core_type = #tpu.core_type<tc>, window_params = [{transform_indices = @transform_0, window_bounds = array<i64: 1, 16, 256>}, {pipeline_mode = #tpu.pipeline_mode<synchronous>, transform_indices = @transform_1, window_bounds = array<i64: 16, 4>}, {pipeline_mode = #tpu.pipeline_mode<synchronous>, transform_indices = @transform_2, window_bounds = array<i64: 4, 16>}, {transform_indices = @transform_3, window_bounds = array<i64: 1, 16, 256>}]} {
    %c0 = arith.constant 0 : index
    %c0_0 = arith.constant 0 : index
    %c0_1 = arith.constant 0 : index
    %0 = vector.load %arg1[%c0, %c0_0, %c0_1] : memref<1x16x256xf32, #tpu.memory_space<vmem>>, vector<1x16x256xf32>
    %cst = arith.constant dense<0.000000e+00> : vector<1x16xf32>
    %1 = vector.multi_reduction <add>, %0, %cst [2] : vector<1x16x256xf32> to vector<1x16xf32>
    %cst_2 = arith.constant 2.560000e+02 : f32
    %2 = vector.broadcast %cst_2 : f32 to vector<1x16xf32>
    %3 = arith.divf %1, %2 : vector<1x16xf32>
    %c0_3 = arith.constant 0 : index
    %c0_4 = arith.constant 0 : index
    %4 = vector.load %arg2[%c0_3, %c0_4] : memref<16x4xf32, #tpu.memory_space<vmem>>, vector<16x4xf32>
    %cst_5 = arith.constant dense<0.000000e+00> : vector<1x4xf32>
    %5 = tpu.matmul %3, %4, %cst_5 {dimension_numbers = #tpu.dot_dimension_numbers<[1], [0], [0], [1], [0, 0, 1, 1], [], []>} : vector<1x16xf32>, vector<16x4xf32>, vector<1x4xf32> -> vector<1x4xf32>
    %cst_6 = arith.constant 0.000000e+00 : f32
    %6 = vector.broadcast %cst_6 : f32 to vector<1x4xf32>
    %7 = arith.maximumf %5, %6 : vector<1x4xf32>
    %c0_7 = arith.constant 0 : index
    %c0_8 = arith.constant 0 : index
    %8 = vector.load %arg3[%c0_7, %c0_8] : memref<4x16xf32, #tpu.memory_space<vmem>>, vector<4x16xf32>
    %cst_9 = arith.constant dense<0.000000e+00> : vector<1x16xf32>
    %9 = tpu.matmul %7, %8, %cst_9 {dimension_numbers = #tpu.dot_dimension_numbers<[1], [0], [0], [1], [0, 0, 1, 1], [], []>} : vector<1x4xf32>, vector<4x16xf32>, vector<1x16xf32> -> vector<1x16xf32>
    %10 = arith.negf %9 : vector<1x16xf32>
    %11 = math.exp %10 : vector<1x16xf32>
    %cst_10 = arith.constant 1.000000e+00 : f32
    %12 = vector.broadcast %cst_10 : f32 to vector<1x16xf32>
    %13 = arith.addf %12, %11 : vector<1x16xf32>
    %14 = arith.divf %12, %13 : vector<1x16xf32>
    %15 = vector.shape_cast %14 : vector<1x16xf32> to vector<1x16x1xf32>
    %16 = vector.broadcast %15 : vector<1x16x1xf32> to vector<1x16x256xf32>
    %17 = arith.mulf %0, %16 : vector<1x16x256xf32>
    %c0_11 = arith.constant 0 : index
    %c0_12 = arith.constant 0 : index
    %c0_13 = arith.constant 0 : index
    %18 = vector.load %arg4[%c0_11, %c0_12, %c0_13] : memref<1x16x256xf32, #tpu.memory_space<vmem>>, vector<1x16x256xf32>
    tpu.vector_store %arg4[%c0_11, %c0_12, %c0_13], %17 {strides = array<i32>} : memref<1x16x256xf32, #tpu.memory_space<vmem>>, vector<1x16x256xf32>,
    return
  }
  func.func @transform_0(%arg0: i32) -> (i32, i32, i32) {
    %c0_i32 = arith.constant 0 : i32
    %c0_i32_0 = arith.constant 0 : i32
    %c0_i32_1 = arith.constant 0 : i32
    return %arg0, %c0_i32, %c0_i32_0 : i32, i32, i32
  }
  func.func @transform_1(%arg0: i32) -> (i32, i32) {
    %c0_i32 = arith.constant 0 : i32
    %c0_i32_0 = arith.constant 0 : i32
    %c0_i32_1 = arith.constant 0 : i32
    return %c0_i32, %c0_i32_0 : i32, i32
  }
  func.func @transform_2(%arg0: i32) -> (i32, i32) {
    %c0_i32 = arith.constant 0 : i32
    %c0_i32_0 = arith.constant 0 : i32
    %c0_i32_1 = arith.constant 0 : i32
    return %c0_i32, %c0_i32_0 : i32, i32
  }
  func.func @transform_3(%arg0: i32) -> (i32, i32, i32) {
    %c0_i32 = arith.constant 0 : i32
    %c0_i32_0 = arith.constant 0 : i32
    %c0_i32_1 = arith.constant 0 : i32
    return %arg0, %c0_i32, %c0_i32_0 : i32, i32, i32
  }
}

</mosaic_0001>

<llo_original>
// kernel: tpu_custom_call.1
$region0: #{tpu_custom_call.1}
  #allocation0 [shape = 'u32[]', space=smem, size = 0x4, offset = 0x4, fixed_abs, tag = 'smem constant byte address 0x4 - core index']
  #allocation1 [shape = 'u32[144,128]{1,0:T(1,128)}', space=vmem, size = 0x12000, scoped, tag = 'internal scratch']
  %s0 = inlined_call_operand.hbm [shape: f32[2,16,256], index: 0, kind: input, shape index: {}]
  %s1 = inlined_call_operand.vmem [shape: f32[16,4], index: 1, kind: input, shape index: {}]
  %s2 = inlined_call_operand.vmem [shape: f32[4,16], index: 2, kind: input, shape index: {}]
  %s3 = inlined_call_operand.hbm [shape: f32[2,16,256], index: 3, kind: output, shape index: {}]
  %s4 = sld [smem:[#allocation0]]
  $region49: #{tpu_custom_call.1} parent=0
    _
  %s6 = ssub.s32 1, %s4
  %s7 = scalar_select 0, %s6, %s4
  $region1: #{tpu_custom_call.1} parent=0
    #allocation2 [shape = 'u8[32768]{0}', space=vmem, size = 0x8000, scoped, tag = 'input window, operand 0']
    #allocation3 [shape = 's32[2]{0}', space=sflag, size = 0x8, scoped, tag = 'scoped memory for tpu_custom_call.1']
    #allocation4 [shape = 's32[2]{0}', space=sflag, size = 0x8, scoped, tag = 'scoped memory for tpu_custom_call.1']
    #allocation5 [shape = 'u8[32768]{0}', space=vmem, size = 0x8000, scoped, tag = 'output window, operand 0']
    %8 = vsyncpa [#allocation3], 0
    %s9 = scalar_lea.sflag [#allocation3], 1
    %10 = vsyncpa %s9, 0
    %11 = vsyncpa [#allocation4], 0
    %s12 = scalar_lea.sflag [#allocation4], 1
    %13 = vsyncpa %s12, 0
    loop: start=0, step=1, limit=4
    $region2: #{tpu_custom_call.1} parent=1 // loop_pre_header
      _
    $region3: #{tpu_custom_call.1} parent=1 // loop_header
      %s15 = sphi 0, %s19
      %p16 = scmp.ge.s32.totalorder %s15, 4
      %s25 = sphi 0, %s27
      %s28 = sphi 0, %s25
      %s29 = sphi 0, %s28
      %s45 = sphi 0, %s29
      %s49 = sphi 0, %s49
      %s51 = sphi 0, %s49
      %s52 = sphi 0, %s51
      %s66 = sphi 0, %s52
      %s70 = sphi 0, %s70
      %s72 = sphi 0, %s70
      %s73 = sphi 0, %s72
      %s87 = sphi 0, %s73
      %s93 = sphi 0, %s95
      %s96 = sphi 0, %s93
      %s97 = sphi 0, %s96
      %s113 = sphi 0, %s97
    $region4: #{tpu_custom_call.1} parent=1 // loop_header_branch
      %18 = sbr.rel (%p16) target = $region8
    $region5: #{tpu_custom_call.1} parent=1 // loop_body
      %s20 = ssub.s32 %s15, 1
      %s21 = ssub.s32 %s15, 2
      %s22 = sadd.s32 %s15, 1
      %s23 = ssub.s32 %s15, %s22
      %p24 = scmp.eq.s32.totalorder %s23, 0
      %s26 = sadd.s32 %s25, 1
      %s27 = scalar_select %p24, %s25, %s26
      %p30 = pneg %p24
      %p31 = scmp.eq.s32.totalorder %s15, 1
      %p32 = por %p30, %p31
      %p33 = scmp.ne.s32.totalorder %s25, %s28
      %p34 = scmp.eq.s32.totalorder %s15, 0
      %p35 = por %p33, %p34
      %p36 = scmp.ne.s32.totalorder %s25, %s28
      %p37 = scmp.eq.s32.totalorder %s20, 1
      %p38 = por %p36, %p37
      %p39 = scmp.ne.s32.totalorder %s28, %s29
      %p40 = scmp.eq.s32.totalorder %s20, 0
      %p41 = por %p39, %p40
      %p42 = scmp.ne.s32.totalorder %s28, %s29
      %p43 = scmp.eq.s32.totalorder %s21, 1
      %p44 = por %p42, %p43
      %p46 = scmp.ne.s32.totalorder %s29, %s45
      %p47 = scmp.eq.s32.totalorder %s21, 0
      %p48 = por %p46, %p47
      %s50 = sadd.s32 %s49, 1
      %p53 = scmp.eq.s32.totalorder %s15, 1
      %p54 = scmp.ne.s32.totalorder %s49, %s51
      %p55 = scmp.eq.s32.totalorder %s15, 0
      %p56 = por %p54, %p55
      %p57 = scmp.ne.s32.totalorder %s49, %s51
      %p58 = scmp.eq.s32.totalorder %s20, 1
      %p59 = por %p57, %p58
      %p60 = scmp.ne.s32.totalorder %s51, %s52
      %p61 = scmp.eq.s32.totalorder %s20, 0
      %p62 = por %p60, %p61
      %p63 = scmp.ne.s32.totalorder %s51, %s52
      %p64 = scmp.eq.s32.totalorder %s21, 1
      %p65 = por %p63, %p64
      %p67 = scmp.ne.s32.totalorder %s52, %s66
      %p68 = scmp.eq.s32.totalorder %s21, 0
      %p69 = por %p67, %p68
      %s71 = sadd.s32 %s70, 1
      %p74 = scmp.eq.s32.totalorder %s15, 1
      %p75 = scmp.ne.s32.totalorder %s70, %s72
      %p76 = scmp.eq.s32.totalorder %s15, 0
      %p77 = por %p75, %p76
      %p78 = scmp.ne.s32.totalorder %s70, %s72
      %p79 = scmp.eq.s32.totalorder %s20, 1
      %p80 = por %p78, %p79
      %p81 = scmp.ne.s32.totalorder %s72, %s73
      %p82 = scmp.eq.s32.totalorder %s20, 0
      %p83 = por %p81, %p82
      %p84 = scmp.ne.s32.totalorder %s72, %s73
      %p85 = scmp.eq.s32.totalorder %s21, 1
      %p86 = por %p84, %p85
      %p88 = scmp.ne.s32.totalorder %s73, %s87
      %p89 = scmp.eq.s32.totalorder %s21, 0
      %p90 = por %p88, %p89
      %s91 = ssub.s32 %s15, %s22
      %p92 = scmp.eq.s32.totalorder %s91, 0
      %s94 = sadd.s32 %s93, 1
      %s95 = scalar_select %p92, %s93, %s94
      %p98 = pneg %p92
      %p99 = scmp.eq.s32.totalorder %s15, 1
      %p100 = por %p98, %p99
      %p101 = scmp.ne.s32.totalorder %s93, %s96
      %p102 = scmp.eq.s32.totalorder %s15, 0
      %p103 = por %p101, %p102
      %p104 = scmp.ne.s32.totalorder %s93, %s96
      %p105 = scmp.eq.s32.totalorder %s20, 1
      %p106 = por %p104, %p105
      %p107 = scmp.ne.s32.totalorder %s96, %s97
      %p108 = scmp.eq.s32.totalorder %s20, 0
      %p109 = por %p107, %p108
      %p110 = scmp.ne.s32.totalorder %s96, %s97
      %p111 = scmp.eq.s32.totalorder %s21, 1
      %p112 = por %p110, %p111
      %p114 = scmp.ne.s32.totalorder %s97, %s113
      %p115 = scmp.eq.s32.totalorder %s21, 0
      %p116 = por %p114, %p115
      %p117 = scmp.le.s32.totalorder 1, %s15
      %p118 = scmp.lt.s32.totalorder %s15, 3
      %p119 = pnand %p117, %p118
      %p120 = pneg %p119
      // Predicated region
      $region9: #{tpu_custom_call.1} parent=5 // pred_check
        _
      $region10: #{tpu_custom_call.1} parent=5 // pred_check_branch
        %122 = sbr.rel (%p119) target = $region12
      $region11: #{tpu_custom_call.1} parent=5 // pred_region
        %s123 = ssub.s32 %s15, 1
        // Predicated region
        $region13: #{tpu_custom_call.1} parent=11 // pred_check
          %p124 = pneg %p62
        $region14: #{tpu_custom_call.1} parent=11 // pred_check_branch
          %126 = sbr.rel (%p124) target = $region16
        $region15: #{tpu_custom_call.1} parent=11 // pred_region
          _
        $region16: #{tpu_custom_call.1} parent=11 // pred_fallthru
          _
        // Predicated region
        $region17: #{tpu_custom_call.1} parent=11 // pred_check
          %p127 = pneg %p83
        $region18: #{tpu_custom_call.1} parent=11 // pred_check_branch
          %129 = sbr.rel (%p127) target = $region20
        $region19: #{tpu_custom_call.1} parent=11 // pred_region
          _
        $region20: #{tpu_custom_call.1} parent=11 // pred_fallthru
          _
      $region12: #{tpu_custom_call.1} parent=5 // pred_fallthru
        _
      %p130 = scmp.lt.s32.totalorder %s15, 2
      // Predicated region
      $region21: #{tpu_custom_call.1} parent=5 // pred_check
        %p131 = pneg %p130
      $region22: #{tpu_custom_call.1} parent=5 // pred_check_branch
        %133 = sbr.rel (%p131) target = $region24
      $region23: #{tpu_custom_call.1} parent=5 // pred_region
        // Predicated region
        $region25: #{tpu_custom_call.1} parent=23 // pred_check
          %p134 = pneg %p35
        $region26: #{tpu_custom_call.1} parent=23 // pred_check_branch
          %136 = sbr.rel (%p134) target = $region28
        $region27: #{tpu_custom_call.1} parent=23 // pred_region
          %s137 = sand.u32 %s25, 1
          %s138 = scalar_lea.sflag [#allocation3], %s137
          %s139 = sand.u32 %s25, 1
          %s140 = smul.addr %s139, 32
          %s141 = scalar_lea.vmem [#allocation2], %s140
          %s143 = ssub.s32 512, 512
          %144 = vsyncadd %s138, %s143
          %s145 = smul.addr %s15, 4
          %s146 = smul.addr %s145, 128
          %s147 = scalar_lea.hbm %s0, %s146
          %s148 = sshll.u32 %s141, 4
          %s149 = int_to_ptr.vmem [resolvable:$true] %s148
          %154 = dma.hbm_to_vmem [thread:$0]  %s147, 512, %s149, %s138, 256, 256, 16
        $region28: #{tpu_custom_call.1} parent=23 // pred_fallthru
          _
      $region24: #{tpu_custom_call.1} parent=5 // pred_fallthru
        _
      %p155 = scmp.le.s32.totalorder 1, %s15
      %p156 = scmp.lt.s32.totalorder %s15, 3
      %p157 = pnand %p155, %p156
      %p158 = pneg %p157
      // Predicated region
      $region29: #{tpu_custom_call.1} parent=5 // pred_check
        _
      $region30: #{tpu_custom_call.1} parent=5 // pred_check_branch
        %160 = sbr.rel (%p157) target = $region32
      $region31: #{tpu_custom_call.1} parent=5 // pred_region
        %s161 = ssub.s32 %s15, 1
        %s162 = sand.u32 %s28, 1
        %s163 = scalar_lea.sflag [#allocation3], %s162
        %s164 = sand.u32 %s28, 1
        %s165 = smul.addr %s164, 32
        %s166 = scalar_lea.vmem [#allocation2], %s165
        // Predicated region
        $region33: #{tpu_custom_call.1} parent=31 // pred_check
          %p167 = pneg %p41
        $region34: #{tpu_custom_call.1} parent=31 // pred_check_branch
          %169 = sbr.rel (%p167) target = $region36
        $region35: #{tpu_custom_call.1} parent=31 // pred_region
          %170 = dma.done %s163, 512
        $region36: #{tpu_custom_call.1} parent=31 // pred_fallthru
          _
        %s171 = sand.u32 %s28, 1
        %s172 = scalar_lea.sflag [#allocation3], %s171
        %s173 = sand.u32 %s28, 1
        %s174 = smul.addr %s173, 32
        %s175 = scalar_lea.vmem [#allocation2], %s174
        %p176 = pneg %p41
        %p177 = pneg %p38
        %p178 = pneg %p62
        %p179 = pneg %p59
        %p180 = pneg %p83
        %p181 = pneg %p80
        %p182 = pneg %p109
        %p183 = pneg %p106
        %s184 = sand.u32 %s96, 1
        %s185 = scalar_lea.sflag [#allocation4], %s184
        %s186 = sand.u32 %s96, 1
        %s187 = smul.addr %s186, 32
        %s188 = scalar_lea.vmem [#allocation5], %s187
        %v189 = vld [vmem:[%s166] sm:$0xff]
        %v190 = vld [vmem:[%s166 + $0x8] sm:$0xff]
        %v191 = vld [vmem:[%s166 + $0x10] sm:$0xff]
        %v192 = vld [vmem:[%s166 + $0x18] sm:$0xff]
        %v193 = vadd.f32 %v189, %v190
        %194 = vadd.xlane.f32.xlu0 %v193
        %v195 = vpop.xlane.xlu0 %194
        %v196 = vadd.f32 %v191, %v192
        %197 = vadd.xlane.f32.xlu0 %v196
        %v198 = vpop.xlane.xlu0 %197
        %v199 = vrcp.pop 256.0
        %v200 = vmul.f32 %v195, %v199
        %v201 = vmul.f32 %v198, %v199
        %v202 = vld [vmem:[%s1] sm:$0xff]
        %v203 = vld [vmem:[%s1 + $0x8] sm:$0xff]
        %v206 = vlaneseq
        %v207 = vand.u32 %v206, 127
        %v208 = vlaneseq
        %v209 = vshrl.u32 %v208, 7
        %v210 = vsub.s32 %v207, %v209
        %v211 = vrot.slane %v200, %v210
        %v212 = vadd.s32 %v207, 4294967288
        %v213 = vlaneseq
        %v214 = vshrl.u32 %v213, 7
        %v215 = vsub.s32 %v212, %v214
        %v216 = vrot.slane %v201, %v215
        %vm217 = vcmask 130112
        %v218 = vsel %vm217, %v216, %v211
        %vm219 = vcmask 130048
        %v220 = vsel %vm219, %v218, 0
        %222 = vmatprep.subr.mxu0 0.0
        %223 = vmatpush1.msra.mxu0 %v202
        %224 = vmatprep.subr.mxu0 0.0
        %225 = vmatpush1.msra.mxu0 %v203
        %226 = vmatprep.subr.mxu0 0.0
        %227 = vmatpush1.msra.mxu0 0.0
        %228 = vmatprep.subr.mxu0 0.0
        %229 = vmatpush1.msra.mxu0 0.0
        %230 = vmatprep.subr.mxu0 0.0
        %231 = vmatpush1.msra.mxu0 0.0
        %232 = vmatprep.subr.mxu0 0.0
        %233 = vmatpush1.msra.mxu0 0.0
        %234 = vmatprep.subr.mxu0 0.0
        %235 = vmatpush1.msra.mxu0 0.0
        %236 = vmatprep.subr.mxu0 0.0
        %237 = vmatpush1.msra.mxu0 0.0
        %238 = vmatprep.subr.mxu0 0.0
        %239 = vmatpush1.msra.mxu0 0.0
        %240 = vmatprep.subr.mxu0 0.0
        %241 = vmatpush1.msra.mxu0 0.0
        %242 = vmatprep.subr.mxu0 0.0
        %243 = vmatpush1.msra.mxu0 0.0
        %244 = vmatprep.subr.mxu0 0.0
        %245 = vmatpush1.msra.mxu0 0.0
        %246 = vmatprep.subr.mxu0 0.0
        %247 = vmatpush1.msra.mxu0 0.0
        %248 = vmatprep.subr.mxu0 0.0
        %249 = vmatpush1.msra.mxu0 0.0
        %250 = vmatprep.subr.mxu0 0.0
        %251 = vmatpush1.msra.mxu0 0.0
        %252 = vmatprep.subr.mxu0 0.0
        %253 = vmatpush1.msra.mxu0 0.0
        %254 = vmatprep.subr.mxu0 0.0
        %255 = vmatpush1.msra.mxu0 0.0
        %256 = vmatprep.subr.mxu0 0.0
        %257 = vmatpush1.msra.mxu0 0.0
        %258 = vmatprep.subr.mxu0 0.0
        %259 = vmatpush1.msra.mxu0 0.0
        %260 = vmatprep.subr.mxu0 0.0
        %261 = vmatpush1.msra.mxu0 0.0
        %262 = vmatprep.subr.mxu0 0.0
        %263 = vmatpush1.msra.mxu0 0.0
        %264 = vmatprep.subr.mxu0 0.0
        %265 = vmatpush1.msra.mxu0 0.0
        %266 = vmatprep.subr.mxu0 0.0
        %267 = vmatpush1.msra.mxu0 0.0
        %268 = vmatprep.subr.mxu0 0.0
        %269 = vmatpush1.msra.mxu0 0.0
        %270 = vmatprep.subr.mxu0 0.0
        %271 = vmatpush1.msra.mxu0 0.0
        %272 = vmatprep.subr.mxu0 0.0
        %273 = vmatpush1.msra.mxu0 0.0
        %274 = vmatprep.subr.mxu0 0.0
        %275 = vmatpush1.msra.mxu0 0.0
        %276 = vmatprep.subr.mxu0 0.0
        %277 = vmatpush1.msra.mxu0 0.0
        %278 = vmatprep.subr.mxu0 0.0
        %279 = vmatpush1.msra.mxu0 0.0
        %280 = vmatprep.subr.mxu0 0.0
        %281 = vmatpush1.msra.mxu0 0.0
        %282 = vmatprep.subr.mxu0 0.0
        %283 = vmatpush1.msra.mxu0 0.0
        %284 = vmatprep.subr.mxu0 0.0
        %285 = vmatpush1.msra.mxu0 0.0
        %286 = vmatprep.mubr.f32.mxu0 0.0
        %287 = vmatmul.mubr.f32.gmra.mrb[0].mxu0 %v220
        %v288 = vpop.f32.mrb[0].mxu0
        %v289 = vadd.f32 0.0, %v288
        %v290 = vpop.f32.mrb[0].mxu0
        %291 = vdwg.mxu0
        %v292 = vmax.f32 %v289, 0.0
        %v293 = vld [vmem:[%s2] sm:$0xf]
        %vm294 = vcmask 31744
        %v296 = vsel %vm294, %v292, 0
        %vm298 = vcmask 1043456
        %v300 = vsel %vm298, %v293, 0
        %302 = vmatprep.subr.mxu0 0.0
        %303 = vmatpush1.msra.mxu0 %v300
        %304 = vmatprep.subr.mxu0 0.0
        %305 = vmatpush1.msra.mxu0 0.0
        %306 = vmatprep.subr.mxu0 0.0
        %307 = vmatpush1.msra.mxu0 0.0
        %308 = vmatprep.subr.mxu0 0.0
        %309 = vmatpush1.msra.mxu0 0.0
        %310 = vmatprep.subr.mxu0 0.0
        %311 = vmatpush1.msra.mxu0 0.0
        %312 = vmatprep.subr.mxu0 0.0
        %313 = vmatpush1.msra.mxu0 0.0
        %314 = vmatprep.subr.mxu0 0.0
        %315 = vmatpush1.msra.mxu0 0.0
        %316 = vmatprep.subr.mxu0 0.0
        %317 = vmatpush1.msra.mxu0 0.0
        %318 = vmatprep.subr.mxu0 0.0
        %319 = vmatpush1.msra.mxu0 0.0
        %320 = vmatprep.subr.mxu0 0.0
        %321 = vmatpush1.msra.mxu0 0.0
        %322 = vmatprep.subr.mxu0 0.0
        %323 = vmatpush1.msra.mxu0 0.0
        %324 = vmatprep.subr.mxu0 0.0
        %325 = vmatpush1.msra.mxu0 0.0
        %326 = vmatprep.subr.mxu0 0.0
        %327 = vmatpush1.msra.mxu0 0.0
        %328 = vmatprep.subr.mxu0 0.0
        %329 = vmatpush1.msra.mxu0 0.0
        %330 = vmatprep.subr.mxu0 0.0
        %331 = vmatpush1.msra.mxu0 0.0
        %332 = vmatprep.subr.mxu0 0.0
        %333 = vmatpush1.msra.mxu0 0.0
        %334 = vmatprep.subr.mxu0 0.0
        %335 = vmatpush1.msra.mxu0 0.0
        %336 = vmatprep.subr.mxu0 0.0
        %337 = vmatpush1.msra.mxu0 0.0
        %338 = vmatprep.subr.mxu0 0.0
        %339 = vmatpush1.msra.mxu0 0.0
        %340 = vmatprep.subr.mxu0 0.0
        %341 = vmatpush1.msra.mxu0 0.0
        %342 = vmatprep.subr.mxu0 0.0
        %343 = vmatpush1.msra.mxu0 0.0
        %344 = vmatprep.subr.mxu0 0.0
        %345 = vmatpush1.msra.mxu0 0.0
        %346 = vmatprep.subr.mxu0 0.0
        %347 = vmatpush1.msra.mxu0 0.0
        %348 = vmatprep.subr.mxu0 0.0
        %349 = vmatpush1.msra.mxu0 0.0
        %350 = vmatprep.subr.mxu0 0.0
        %351 = vmatpush1.msra.mxu0 0.0
        %352 = vmatprep.subr.mxu0 0.0
        %353 = vmatpush1.msra.mxu0 0.0
        %354 = vmatprep.subr.mxu0 0.0
        %355 = vmatpush1.msra.mxu0 0.0
        %356 = vmatprep.subr.mxu0 0.0
        %357 = vmatpush1.msra.mxu0 0.0
        %358 = vmatprep.subr.mxu0 0.0
        %359 = vmatpush1.msra.mxu0 0.0
        %360 = vmatprep.subr.mxu0 0.0
        %361 = vmatpush1.msra.mxu0 0.0
        %362 = vmatprep.subr.mxu0 0.0
        %363 = vmatpush1.msra.mxu0 0.0
        %364 = vmatprep.subr.mxu0 0.0
        %365 = vmatpush1.msra.mxu0 0.0
        %366 = vmatprep.mubr.f32.mxu0 0.0
        %367 = vmatmul.mubr.f32.gmra.mrb[0].mxu0 %v296
        %v368 = vpop.f32.mrb[0].mxu0
        %v369 = vadd.f32 0.0, %v368
        %v370 = vpop.f32.mrb[0].mxu0
        %371 = vdwg.mxu0
        %v372 = vxor.u32 %v369, 2147483648
        %v373 = vmul.f32 %v372, 1.442695
        %v374 = vpow.pop %v373
        %v375 = vadd.f32 %v374, 1.0
        %v376 = vrcp.pop %v375
        %v377 = vmul.f32 1.0, %v376
        %v378 = vlaneseq
        %v379 = vshrl.u32 %v378, 7
        %v380 = vsub.s32 0, %v379
        %v381 = vrot.slane %v377, %v380
        %383 = vbcast.lane.b32.xlu0 %v381, 256
        %v384 = vpop.permute.xlu0 %383
        %s386 = sor.u32 256, 8
        %387 = vbcast.lane.b32.xlu0 %v381, %s386
        %v388 = vpop.permute.xlu0 %387
        %v389 = vmul.f32 %v189, %v384
        %v390 = vmul.f32 %v190, %v384
        %v391 = vmul.f32 %v191, %v388
        %v392 = vmul.f32 %v192, %v388
        %393 = vst [vmem:[%s188] sm:$0xff] %v389
        %394 = vst [vmem:[%s188 + $0x8] sm:$0xff] %v390
        %395 = vst [vmem:[%s188 + $0x10] sm:$0xff] %v391
        %396 = vst [vmem:[%s188 + $0x18] sm:$0xff] %v392
        %s397 = sand.u32 %s96, 1
        %s398 = scalar_lea.sflag [#allocation4], %s397
        %s399 = sand.u32 %s96, 1
        %s400 = smul.addr %s399, 32
        %s401 = scalar_lea.vmem [#allocation5], %s400
        // Predicated region
        $region37: #{tpu_custom_call.1} parent=31 // pred_check
          %p402 = pneg %p106
        $region38: #{tpu_custom_call.1} parent=31 // pred_check_branch
          %404 = sbr.rel (%p402) target = $region40
        $region39: #{tpu_custom_call.1} parent=31 // pred_region
          %s406 = ssub.s32 512, 512
          %407 = vsyncadd %s398, %s406
          %s408 = smul.addr %s20, 4
          %s409 = smul.addr %s408, 128
          %s410 = scalar_lea.hbm %s3, %s409
          %s411 = sshll.u32 %s401, 4
          %s412 = int_to_ptr.vmem [resolvable:$true] %s411
          %417 = dma.vmem_to_hbm [thread:$0]  %s412, 512, %s410, %s398, 256, 256, 16
        $region40: #{tpu_custom_call.1} parent=31 // pred_fallthru
          _
      $region32: #{tpu_custom_call.1} parent=5 // pred_fallthru
        _
      %p418 = scmp.le.s32.totalorder 2, %s15
      // Predicated region
      $region41: #{tpu_custom_call.1} parent=5 // pred_check
        %p419 = pneg %p418
      $region42: #{tpu_custom_call.1} parent=5 // pred_check_branch
        %421 = sbr.rel (%p419) target = $region44
      $region43: #{tpu_custom_call.1} parent=5 // pred_region
        %s422 = ssub.s32 %s15, 2
        // Predicated region
        $region45: #{tpu_custom_call.1} parent=43 // pred_check
          %p423 = pneg %p112
        $region46: #{tpu_custom_call.1} parent=43 // pred_check_branch
          %425 = sbr.rel (%p423) target = $region48
        $region47: #{tpu_custom_call.1} parent=43 // pred_region
          %s426 = sand.u32 %s97, 1
          %s427 = scalar_lea.sflag [#allocation4], %s426
          %s428 = sand.u32 %s97, 1
          %s429 = smul.addr %s428, 32
          %s430 = scalar_lea.vmem [#allocation5], %s429
          %431 = dma.done %s427, 512
        $region48: #{tpu_custom_call.1} parent=43 // pred_fallthru
          _
      $region44: #{tpu_custom_call.1} parent=5 // pred_fallthru
        _
    $region6: #{tpu_custom_call.1} parent=1 // loop_footer
      %s19 = sadd.s32 1, %s15
    $region7: #{tpu_custom_call.1} parent=1 // loop_footer_branch
      %14 = sbr.rel target = $region3
    $region8: #{tpu_custom_call.1} parent=1 // loop_exit
      _
    %432 = vsyncpa [#allocation3], 1
    %s433 = scalar_lea.sflag [#allocation3], 1
    %434 = vsyncpa %s433, 1
    %435 = vsyncpa [#allocation4], 1
    %s436 = scalar_lea.sflag [#allocation4], 1
    %437 = vsyncpa %s436, 1

</llo_original>
